<compile_context>
chip_gen: v5e
topology: v5e:2x2
jax: 0.10.0
libtpu: 0.0.40
codegen_flags: <defaults>
</compile_context>

<pallas_src>
import jax
import jax.numpy as jnp
from jax.experimental import pallas as pl
from jax.experimental.pallas import tpu as pltpu

NUM_TORQUES = 2
_LANE = 128


# --------------------------------------------------------------------------
# One-time parameter preparation (parameter-load time, NOT per forward call).
# --------------------------------------------------------------------------
def _fold_torque_into_params(weight, bias, *, compute_dtype=jnp.bfloat16):
    """weight: (F_out, F_in) PyTorch layout; bias: (F_out,).

    Returns (wT, b, f_out):
      wT : (F_in, F_out_pad) in compute_dtype, torque bypass folded in and
           output dim zero-padded to a multiple of 128 (lane-dense stores).
      b  : (1, F_out_pad) in f32 (bias add stays f32).
      f_out : number of valid output columns.
    """
    f_out, f_in = weight.shape
    wT = weight.T.astype(jnp.float32)                          # (F_in, F_out)
    # remove_torque: matmul must ignore the torque input columns.
    row = jnp.arange(f_in)[:, None]
    wT = jnp.where(row >= f_in - NUM_TORQUES, 0.0, wT)
    # add_torque: pass torques straight through to the last output columns.
    rows = jnp.arange(f_in - NUM_TORQUES, f_in)
    cols = jnp.arange(f_out - NUM_TORQUES, f_out)
    wT = wT.at[rows, cols].add(1.0)
    # Lane-dense output: pad F_out to a multiple of 128 with zero columns.
    f_out_pad = pl.cdiv(f_out, _LANE) * _LANE
    b = bias.astype(jnp.float32)
    if f_out_pad != f_out:
        wT = jnp.pad(wT, ((0, 0), (0, f_out_pad - f_out)))
        b = jnp.pad(b, (0, f_out_pad - f_out))
    return wT.astype(compute_dtype), b.reshape(1, f_out_pad), f_out


# --------------------------------------------------------------------------
# Kernel: pure MXU matmul + bias add (all masking pre-folded into wT).
# --------------------------------------------------------------------------
def _statemap_kernel(x_ref, wT_ref, b_ref, o_ref):
    # x: (b_tile, F_in)  wT: (F_in, tn)  b: (1, tn)  o: (b_tile, tn)
    x = x_ref[...].astype(wT_ref.dtype)        # bf16 MXU path when wT is bf16
    y = jnp.dot(x, wT_ref[...], preferred_element_type=jnp.float32)
    o_ref[...] = (y + b_ref[...]).astype(o_ref.dtype)


# --------------------------------------------------------------------------
# Tiling / budgeting helpers.
# --------------------------------------------------------------------------
def _choose_b_tile(batch, x_dtype):
    # Sublane packing: 16 rows per vreg sublane group for 16-bit x, else 8.
    sub = 16 if jnp.dtype(x_dtype).itemsize == 2 else 8
    if batch <= sub:
        return batch                     # single full block == full array dim
    # >=2 tiles so the "parallel" grid axis can shard across both v7x cores.
    # Cap 512: measured ~85% of HBM roofline on v6e; safe on v7x's 64 MiB.
    t = min(512, max(sub, batch // 2))
    return max(sub, (t // sub) * sub)


def _choose_tn(f_in, f_out_pad, b_tile, w_bytes, x_bytes, o_bytes,
               budget=24 << 20):
    """Largest F_out tile whose resident + streamed VMEM fits the budget."""
    tn = f_out_pad
    while tn > _LANE:
        resident = 2 * (f_in * tn * w_bytes + tn * 4)          # wT + bias (x2)
        stream = 2 * b_tile * (f_in * x_bytes + tn * o_bytes)  # x + out (x2)
        if resident + stream <= budget:
            break
        tn = pl.cdiv(tn // 2, _LANE) * _LANE
    return tn


# --------------------------------------------------------------------------
# Wrapper.
# --------------------------------------------------------------------------
def state_map_static(x, wT, b, f_out, *, b_tile=None, out_dtype=None,
                     slice_output=True):
    """x: (B, F_in); wT: (F_in, F_out_pad) folded weight; b: (1, F_out_pad)."""
    B, F_in = x.shape
    F_in_w, F_out_pad = wT.shape
    assert F_in_w == F_in, "folded weight does not match input features"

    out_dtype = x.dtype if out_dtype is None else out_dtype
    x_bytes = jnp.dtype(x.dtype).itemsize
    w_bytes = jnp.dtype(wT.dtype).itemsize
    o_bytes = jnp.dtype(out_dtype).itemsize

    if b_tile is None:
        b_tile = _choose_b_tile(B, x.dtype)

    # TODO(synk): mask the final ragged tile in-kernel instead of padding x
    # through HBM (the pad + out[:B] slice each cost an extra HBM pass when
    # B % b_tile != 0).
    B_pad = pl.cdiv(B, b_tile) * b_tile
    x_p = x if B_pad == B else jnp.pad(x, ((0, B_pad - B), (0, 0)))

    tn = _choose_tn(F_in, F_out_pad, b_tile, w_bytes, x_bytes, o_bytes)
    n_b = B_pad // b_tile
    n_n = F_out_pad // tn

    # Explicit VMEM budget: resident weight/bias (x2, conservatively assuming
    # Mosaic still double-buffers the constant-index blocks) + double-buffered
    # streamed x / out tiles.  Floor at the 32 MiB scoped default, cap at the
    # v7x physical 64 MiB so the hint stays valid across chips.
    resident = 2 * (F_in * tn * w_bytes + tn * 4)
    stream = 2 * b_tile * (F_in * x_bytes + tn * o_bytes)
    vmem_limit = int(min(64 << 20, max(32 << 20, 2 * (resident + stream))))

    cost = pl.CostEstimate(
        flops=2 * B_pad * F_in * F_out_pad,
        transcendentals=0,
        bytes_accessed=(B_pad * F_in * x_bytes
                        + F_in * F_out_pad * w_bytes
                        + B_pad * F_out_pad * o_bytes),
    )

    out = pl.pallas_call(
        _statemap_kernel,
        out_shape=jax.ShapeDtypeStruct((B_pad, F_out_pad), out_dtype),
        grid_spec=pltpu.PrefetchScalarGridSpec(
            num_scalar_prefetch=0,
            grid=(n_b, n_n),
            in_specs=[
                pl.BlockSpec((b_tile, F_in), lambda i, j: (i, 0)),  # streamed x
                # TODO(synk): verify in MLIR that the constant-(0,0) weight
                # block collapses to one buffer; pin via pipeline_mode if not.
                pl.BlockSpec((F_in, tn), lambda i, j: (0, j)),      # resident wT
                pl.BlockSpec((1, tn), lambda i, j: (0, j)),         # resident bias
            ],
            out_specs=pl.BlockSpec((b_tile, tn), lambda i, j: (i, j)),
        ),
        compiler_params=pltpu.CompilerParams(
            dimension_semantics=("parallel", "parallel"),
            vmem_limit_bytes=vmem_limit),
        cost_estimate=cost,
    )(x_p, wT, b)

    if B_pad != B:
        out = out[:B]
    if slice_output and F_out_pad != f_out:
        out = out[:, :f_out]
    return out


# --------------------------------------------------------------------------
# Pure-JAX reference (mirrors the PyTorch forward).
# --------------------------------------------------------------------------
def _reference(x, weight, bias):
    f_in = x.shape[-1]
    f_out = weight.shape[0]
    torques = x[:, f_in - NUM_TORQUES:]
    x_clean = x.at[:, f_in - NUM_TORQUES:].set(0.0)
    y = x_clean @ weight.T + bias
    y = y.at[:, f_out - NUM_TORQUES:].add(torques)
    return y


if __name__ == "__main__":
    B, F_IN, F_OUT = 8, 32, 32

    key = jax.random.PRNGKey(0)
    kx, kw, kb = jax.random.split(key, 3)

    x = jax.random.normal(kx, (B, F_IN), dtype=jnp.float32)

    # Deterministic nn.Linear-style init: U(-1/sqrt(fan_in), 1/sqrt(fan_in))
    bound = 1.0 / jnp.sqrt(jnp.float32(F_IN))
    weight = jax.random.uniform(kw, (F_OUT, F_IN), jnp.float32, -bound, bound)
    bias = jax.random.uniform(kb, (F_OUT,), jnp.float32, -bound, bound)

    ref = _reference(x, weight, bias)

    # --- Strict f32 validation path (exact 1e-5 tolerance) -----------------
    wT32, b32, f_out = _fold_torque_into_params(weight, bias,
                                                compute_dtype=jnp.float32)
    out32 = jax.block_until_ready(state_map_static(x, wT32, b32, f_out))
    assert out32.shape == (B, F_OUT)
    assert jnp.allclose(out32, ref, atol=1e-5, rtol=1e-5), "f32 path mismatch"

    # --- Production bf16-MXU path (looser tolerance) ------------------------
    wTbf, bbf, f_out = _fold_torque_into_params(weight, bias,
                                                compute_dtype=jnp.bfloat16)
    outbf = jax.block_until_ready(state_map_static(x, wTbf, bbf, f_out))
    assert outbf.shape == (B, F_OUT)
    assert jnp.allclose(outbf, ref, atol=3e-2, rtol=3e-2), "bf16 path mismatch"

    print("KERNEL_OK")
</pallas_src>

<mosaic_0001>
module attributes {stable_mosaic.version = 11 : i64} {
  func.func @_statemap_kernel(%arg0: i32, %arg1: i32, %arg2: memref<8x32xf32, #tpu.memory_space<vmem>>, %arg3: memref<32x128xf32, #tpu.memory_space<vmem>>, %arg4: memref<1x128xf32, #tpu.memory_space<vmem>>, %arg5: memref<8x128xf32, #tpu.memory_space<vmem>>) attributes {dimension_semantics = [#tpu.dimension_semantics<parallel>, #tpu.dimension_semantics<parallel>], iteration_bounds = array<i64: 1, 1>, scalar_prefetch = 0 : i64, scratch_operands = 0 : i64, tpu.core_type = #tpu.core_type<tc>, window_params = [{transform_indices = @transform_0, window_bounds = array<i64: 8, 32>}, {transform_indices = @transform_1, window_bounds = array<i64: 32, 128>}, {transform_indices = @transform_2, window_bounds = array<i64: 1, 128>}, {transform_indices = @transform_3, window_bounds = array<i64: 8, 128>}]} {
    %c0 = arith.constant 0 : index
    %c0_0 = arith.constant 0 : index
    %0 = vector.load %arg2[%c0, %c0_0] : memref<8x32xf32, #tpu.memory_space<vmem>>, vector<8x32xf32>
    %c0_1 = arith.constant 0 : index
    %c0_2 = arith.constant 0 : index
    %1 = vector.load %arg3[%c0_1, %c0_2] : memref<32x128xf32, #tpu.memory_space<vmem>>, vector<32x128xf32>
    %cst = arith.constant dense<0.000000e+00> : vector<8x128xf32>
    %2 = tpu.matmul %0, %1, %cst {dimension_numbers = #tpu.dot_dimension_numbers<[1], [0], [0], [1], [0, 0, 1, 1], [], []>} : vector<8x32xf32>, vector<32x128xf32>, vector<8x128xf32> -> vector<8x128xf32>
    %c0_3 = arith.constant 0 : index
    %c0_4 = arith.constant 0 : index
    %3 = vector.load %arg4[%c0_3, %c0_4] : memref<1x128xf32, #tpu.memory_space<vmem>>, vector<1x128xf32>
    %4 = vector.broadcast %3 : vector<1x128xf32> to vector<8x128xf32>
    %5 = arith.addf %2, %4 : vector<8x128xf32>
    %c0_5 = arith.constant 0 : index
    %c0_6 = arith.constant 0 : index
    %6 = vector.load %arg5[%c0_5, %c0_6] : memref<8x128xf32, #tpu.memory_space<vmem>>, vector<8x128xf32>
    tpu.vector_store %arg5[%c0_5, %c0_6], %5 {strides = array<i32>} : memref<8x128xf32, #tpu.memory_space<vmem>>, vector<8x128xf32>,
    return
  }
  func.func @transform_0(%arg0: i32, %arg1: i32) -> (i32, i32) {
    %c0_i32 = arith.constant 0 : i32
    %c0_i32_0 = arith.constant 0 : i32
    return %arg0, %c0_i32 : i32, i32
  }
  func.func @transform_1(%arg0: i32, %arg1: i32) -> (i32, i32) {
    %c0_i32 = arith.constant 0 : i32
    %c0_i32_0 = arith.constant 0 : i32
    return %c0_i32, %arg1 : i32, i32
  }
  func.func @transform_2(%arg0: i32, %arg1: i32) -> (i32, i32) {
    %c0_i32 = arith.constant 0 : i32
    %c0_i32_0 = arith.constant 0 : i32
    return %c0_i32, %arg1 : i32, i32
  }
  func.func @transform_3(%arg0: i32, %arg1: i32) -> (i32, i32) {
    %c0_i32 = arith.constant 0 : i32
    return %arg0, %arg1 : i32, i32
  }
}

</mosaic_0001>

<llo_original>
// kernel: tpu_custom_call.1
$region0: #{tpu_custom_call.1}
  #allocation0 [shape = 'u32[]', space=smem, size = 0x4, offset = 0x4, fixed_abs, tag = 'smem constant byte address 0x4 - core index']
  #allocation1 [shape = 'u32[72,128]{1,0:T(1,128)}', space=vmem, size = 0x9000, scoped, tag = 'internal scratch']
  %s0 = inlined_call_operand.hbm [shape: f32[8,32], index: 0, kind: input, shape index: {}]
  %s1 = inlined_call_operand.hbm [shape: f32[32,128], index: 1, kind: input, shape index: {}]
  %s2 = inlined_call_operand.vmem [shape: f32[1,128], index: 2, kind: input, shape index: {}]
  %s3 = inlined_call_operand.hbm [shape: f32[8,128], index: 3, kind: output, shape index: {}]
  %s4 = sld [smem:[#allocation0]]
  $region30: #{tpu_custom_call.1} parent=0
    _
  %s6 = ssub.s32 1, %s4
  %s7 = scalar_select 0, %s6, %s4
  $region1: #{tpu_custom_call.1} parent=0
    #allocation2 [shape = 'u8[4096]{0}', space=vmem, size = 0x1000, scoped, tag = 'input window, operand 0, single buffered']
    #allocation3 [shape = 's32[1]{0}', space=sflag, size = 0x4, scoped, tag = 'scoped memory for tpu_custom_call.1']
    #allocation4 [shape = 's32[1]{0}', space=sflag, size = 0x4, scoped, tag = 'scoped memory for tpu_custom_call.1']
    #allocation5 [shape = 'u8[16384]{0}', space=vmem, size = 0x4000, scoped, tag = 'input window, operand 1, single buffered']
    #allocation6 [shape = 's32[1]{0}', space=sflag, size = 0x4, scoped, tag = 'scoped memory for tpu_custom_call.1']
    #allocation7 [shape = 'u8[4096]{0}', space=vmem, size = 0x1000, scoped, tag = 'output window, operand 0, single buffered']
    %8 = vsyncpa [#allocation3], 0
    %9 = vsyncpa [#allocation6], 0
    %10 = vsyncpa [#allocation4], 0
    // Predicated region
    $region2: #{tpu_custom_call.1} parent=1 // pred_check
      _
    $region3: #{tpu_custom_call.1} parent=1 // pred_check_branch
      %12 = sbr.rel (0) target = $region5
    $region4: #{tpu_custom_call.1} parent=1 // pred_region
      %14 = vsyncadd [#allocation3], 0
      %s16 = sshll.u32 %s0, 4
      %s17 = int_to_ptr.hbm [resolvable:$true] %s16
      %s18 = sshll.u32 [#allocation2], 4
      %s19 = int_to_ptr.vmem [resolvable:$true] %s18
      %21 = dma.hbm_to_vmem [thread:$0]  %s17, 128, %s19, [#allocation3]
    $region5: #{tpu_custom_call.1} parent=1 // pred_fallthru
      _
    // Predicated region
    $region6: #{tpu_custom_call.1} parent=1 // pred_check
      _
    $region7: #{tpu_custom_call.1} parent=1 // pred_check_branch
      %23 = sbr.rel (0) target = $region9
    $region8: #{tpu_custom_call.1} parent=1 // pred_region
      %25 = vsyncadd [#allocation6], 0
      %s26 = sshll.u32 %s1, 4
      %s27 = int_to_ptr.hbm [resolvable:$true] %s26
      %s28 = sshll.u32 [#allocation5], 4
      %s29 = int_to_ptr.vmem [resolvable:$true] %s28
      %34 = dma.hbm_to_vmem [thread:$0]  %s27, 512, %s29, [#allocation6], 128, 128, 8
    $region9: #{tpu_custom_call.1} parent=1 // pred_fallthru
      _
    // Predicated region
    $region10: #{tpu_custom_call.1} parent=1 // pred_check
      _
    $region11: #{tpu_custom_call.1} parent=1 // pred_check_branch
      %36 = sbr.rel (0) target = $region13
    $region12: #{tpu_custom_call.1} parent=1 // pred_region
      _
    $region13: #{tpu_custom_call.1} parent=1 // pred_fallthru
      _
    // Predicated region
    $region14: #{tpu_custom_call.1} parent=1 // pred_check
      _
    $region15: #{tpu_custom_call.1} parent=1 // pred_check_branch
      %38 = sbr.rel (0) target = $region17
    $region16: #{tpu_custom_call.1} parent=1 // pred_region
      %40 = dma.done [#allocation3], 128
    $region17: #{tpu_custom_call.1} parent=1 // pred_fallthru
      _
    // Predicated region
    $region18: #{tpu_custom_call.1} parent=1 // pred_check
      _
    $region19: #{tpu_custom_call.1} parent=1 // pred_check_branch
      %42 = sbr.rel (0) target = $region21
    $region20: #{tpu_custom_call.1} parent=1 // pred_region
      %44 = dma.done [#allocation6], 512
    $region21: #{tpu_custom_call.1} parent=1 // pred_fallthru
      _
    %v45 = vld [vmem:[#allocation2] sm:$0xff]
    %v46 = vld [vmem:[#allocation5] sm:$0xff]
    %v47 = vld [vmem:[#allocation5 + $0x8] sm:$0xff]
    %v48 = vld [vmem:[#allocation5 + $0x10] sm:$0xff]
    %v49 = vld [vmem:[#allocation5 + $0x18] sm:$0xff]
    %v50 = vld [vmem:[%s2] sm:$0x1]
    %v52 = vperm.slane %v50, 0
    %vm54 = vcmask 261120
    %v56 = vsel %vm54, %v45, 0
    %58 = vmatpush.msra.mxu0 0.0
    %59 = vmatpush.msra.mxu0 0.0
    %60 = vmatpush.msra.mxu0 0.0
    %61 = vmatpush.msra.mxu0 0.0
    %62 = vmatpush.msra.mxu0 0.0
    %63 = vmatpush.msra.mxu0 0.0
    %64 = vmatpush.msra.mxu0 0.0
    %65 = vmatpush.msra.mxu0 0.0
    %66 = vmatpush.msra.mxu0 0.0
    %67 = vmatpush.msra.mxu0 0.0
    %68 = vmatpush.msra.mxu0 0.0
    %69 = vmatpush.msra.mxu0 0.0
    %70 = vmatpush.msra.mxu0 %v49
    %71 = vmatpush.msra.mxu0 %v48
    %72 = vmatpush.msra.mxu0 %v47
    %73 = vmatpush.msra.mxu0 %v46
    %74 = vmatmul.f32.gmra.mxu0 %v56
    %v75 = vpop.f32.mrf.mxu0
    %v76 = vadd.f32 %v52, %v75
    %77 = vdwg.mxu0
    %78 = vst [vmem:[#allocation7] sm:$0xff] %v76
    // Predicated region
    $region22: #{tpu_custom_call.1} parent=1 // pred_check
      _
    $region23: #{tpu_custom_call.1} parent=1 // pred_check_branch
      %80 = sbr.rel (0) target = $region25
    $region24: #{tpu_custom_call.1} parent=1 // pred_region
      %82 = vsyncadd [#allocation4], 0
      %s84 = sshll.u32 [#allocation7], 4
      %s85 = int_to_ptr.vmem [resolvable:$true] %s84
      %s86 = sshll.u32 %s3, 4
      %s87 = int_to_ptr.hbm [resolvable:$true] %s86
      %89 = dma.vmem_to_hbm [thread:$0]  %s85, 128, %s87, [#allocation4]
    $region25: #{tpu_custom_call.1} parent=1 // pred_fallthru
      _
    // Predicated region
    $region26: #{tpu_custom_call.1} parent=1 // pred_check
      _
    $region27: #{tpu_custom_call.1} parent=1 // pred_check_branch
      %91 = sbr.rel (0) target = $region29
    $region28: #{tpu_custom_call.1} parent=1 // pred_region
      %93 = dma.done [#allocation4], 128
    $region29: #{tpu_custom_call.1} parent=1 // pred_fallthru
      _
    %94 = vsyncpa [#allocation3], 1
    %95 = vsyncpa [#allocation6], 1
    %96 = vsyncpa [#allocation4], 1

</llo_original>
